<compile_context>
chip_gen: v5e
topology: v5e:2x2
jax: 0.10.0
libtpu: 0.0.40
codegen_flags: <defaults>
</compile_context>

<pallas_src>
import functools

import jax
import jax.numpy as jnp
from jax.experimental import pallas as pl
from jax.experimental.pallas import tpu as pltpu


def _round_up(x, m):
    return (x + m - 1) // m * m


def _ce_rows(logits, next_ids, base_row, n_rows):
    """Per-row cross-entropy for one (R, V) block; zeroed on padded rows."""
    R, V = logits.shape
    m = jnp.max(logits, axis=-1, keepdims=True)
    lse = m + jnp.log(jnp.sum(jnp.exp(logits - m), axis=-1, keepdims=True))
    col = jax.lax.broadcasted_iota(jnp.int32, (R, V), 1)
    tgt = jnp.sum(jnp.where(col == next_ids, logits, 0.0),
                  axis=-1, keepdims=True)
    row = base_row + jax.lax.broadcasted_iota(jnp.int32, (R, 1), 0)
    return jnp.where(row < n_rows, lse - tgt, 0.0)


# ---------------------------------------------------------------------------
# Fast path: embedding table resident in VMEM, gather = one-hot matmul on MXU.
# ---------------------------------------------------------------------------

def _resident_lookup_kernel(toks_ref, emb_ref, logits_ref):
    R = toks_ref.shape[0]
    V = emb_ref.shape[0]
    col = jax.lax.broadcasted_iota(jnp.int32, (R, V), 1)
    onehot = jnp.where(col == toks_ref[...], 1.0, 0.0).astype(emb_ref.dtype)
    logits_ref[...] = jnp.dot(onehot, emb_ref[...],
                              preferred_element_type=jnp.float32)


def _resident_ce_kernel(toks_ref, next_ref, emb_ref, logits_ref, loss_ref, *,
                        n_rows):
    R = toks_ref.shape[0]
    V = emb_ref.shape[0]
    col = jax.lax.broadcasted_iota(jnp.int32, (R, V), 1)
    onehot = jnp.where(col == toks_ref[...], 1.0, 0.0).astype(emb_ref.dtype)
    logits = jnp.dot(onehot, emb_ref[...], preferred_element_type=jnp.float32)
    logits_ref[...] = logits
    base = pl.program_id(0) * R
    loss_ref[...] = _ce_rows(logits, next_ref[...], base, n_rows)


# ---------------------------------------------------------------------------
# Fallback path: table stays in HBM, manual batched row-gather DMAs with
# cross-step double buffering (prefetch block i+1 while computing block i).
# ---------------------------------------------------------------------------

def _stream_gather(toks_sref, emb_hbm, rowbuf, sems, rows_per_block):
    """Gather this grid step's R embedding rows into VMEM; returns (R, V)."""
    R = rows_per_block
    i = pl.program_id(0)
    n_blocks = pl.num_programs(0)

    def issue(block_idx, slot):
        base = block_idx * R
        for r in range(R):                         # static unroll, R is small
            tok = toks_sref[base + r]
            pltpu.make_async_copy(
                emb_hbm.at[pl.ds(tok, 1), :],
                rowbuf.at[slot, pl.ds(r, 1), :],
                sems.at[slot, r],
            ).start()

    @pl.when(i == 0)
    def _():
        issue(0, 0)                                # prime the first block

    slot = i % 2

    @pl.when(i + 1 < n_blocks)
    def _():
        issue(i + 1, 1 - slot)                     # prefetch next block

    for r in range(R):                             # wait this block's rows
        pltpu.make_async_copy(
            emb_hbm.at[pl.ds(0, 1), :],
            rowbuf.at[slot, pl.ds(r, 1), :],
            sems.at[slot, r],
        ).wait()

    return rowbuf[slot]


def _stream_lookup_kernel(toks_sref, emb_hbm, logits_ref, rowbuf, sems, *,
                          rows_per_block):
    logits_ref[...] = _stream_gather(toks_sref, emb_hbm, rowbuf, sems,
                                     rows_per_block)


def _stream_ce_kernel(toks_sref, emb_hbm, next_ref, logits_ref, loss_ref,
                      rowbuf, sems, *, rows_per_block, n_rows):
    rows = _stream_gather(toks_sref, emb_hbm, rowbuf, sems, rows_per_block)
    logits_ref[...] = rows
    base = pl.program_id(0) * rows_per_block
    loss_ref[...] = _ce_rows(rows, next_ref[...], base, n_rows)


# ---------------------------------------------------------------------------
# Module wrapper
# ---------------------------------------------------------------------------

class LookupTable:
    """JAX/Pallas port of the PyTorch `lookup_table` module (forward pass)."""

    _STREAM_ROWS = 8       # rows gathered per grid step in the HBM-gather path

    def __init__(self, vocab_size: int, block_size: int, key=None):
        self.vocab_size = vocab_size
        self.block_size = block_size
        if key is None:
            key = jax.random.PRNGKey(1)
        # nn.Embedding(vocab_size, vocab_size) default init ~ N(0, 1)
        self.emb = jax.random.normal(key, (vocab_size, vocab_size),
                                     dtype=jnp.float32)

    # ---- VMEM budgeting (per-generation: 64 MiB on v7x, 128 MiB v5e/v6e) ----
    @staticmethod
    def _vmem_capacity_bytes():
        try:
            return int(pltpu.get_tpu_info().vmem_capacity_bytes)
        except Exception:
            return 64 * 1024 * 1024                # v7x-safe fallback

    @staticmethod
    def _resident_rows_per_block(n_rows):
        return min(256, _round_up(max(n_rows, 1), 8))

    def _resident_plan(self, n_rows):
        V = self.vocab_size
        R = self._resident_rows_per_block(n_rows)
        # table (possibly double-buffered) + double-buffered (R, V)/(R, 1) blocks
        need = 2 * V * V * 4 + 6 * R * V * 4 + (2 << 20)
        ok = need <= int(0.7 * self._vmem_capacity_bytes())
        return ok, need, R

    # ---- forward -------------------------------------------------------------
    def __call__(self, toks, next_toks=None, force_streamed=False):
        B, T = toks.shape
        V = self.vocab_size
        N = B * T

        # PyTorch raises on out-of-range ids; here we clamp so the id-driven
        # gather can never issue an OOB DMA / OOB one-hot.
        toks_flat = jnp.clip(toks.reshape(N).astype(jnp.int32), 0, V - 1)
        next_flat = None
        if next_toks is not None:
            next_flat = jnp.clip(next_toks.reshape(N).astype(jnp.int32),
                                 0, V - 1)

        resident_ok, resident_bytes, R_res = self._resident_plan(N)
        if force_streamed or not resident_ok:
            logits, loss = self._forward_streamed(toks_flat, next_flat, N)
        else:
            logits, loss = self._forward_resident(toks_flat, next_flat, N,
                                                  R_res, resident_bytes)
        return logits.reshape(B, T, V), loss

    # ---- fast path: resident table -------------------------------------------
    def _forward_resident(self, toks_flat, next_flat, n_rows, R, need_bytes):
        V = self.vocab_size
        n_pad = _round_up(n_rows, R)
        pad = n_pad - n_rows
        grid = (n_pad // R,)

        toks2d = jnp.pad(toks_flat, (0, pad)).reshape(n_pad, 1)

        emb_spec = pl.BlockSpec((V, V), lambda i: (0, 0))        # resident
        toks_spec = pl.BlockSpec((R, 1), lambda i: (i, 0))
        logits_spec = pl.BlockSpec((R, V), lambda i: (i, 0))
        loss_spec = pl.BlockSpec((R, 1), lambda i: (i, 0))

        vmem_limit = None
        if need_bytes > (16 << 20):
            vmem_limit = int(min(0.9 * self._vmem_capacity_bytes(),
                                 need_bytes + (8 << 20)))
        params = pltpu.CompilerParams(dimension_semantics=("parallel",),
                                      vmem_limit_bytes=vmem_limit)

        if next_flat is None:
            cost = pl.CostEstimate(
                flops=2 * n_pad * V * V,
                transcendentals=0,
                bytes_accessed=(V * V + 2 * n_pad * V) * 4)
            logits = pl.pallas_call(
                _resident_lookup_kernel,
                out_shape=jax.ShapeDtypeStruct((n_pad, V), jnp.float32),
                grid_spec=pltpu.PrefetchScalarGridSpec(
                    num_scalar_prefetch=0, grid=grid,
                    in_specs=[toks_spec, emb_spec],
                    out_specs=logits_spec),
                compiler_params=params,
                cost_estimate=cost,
            )(toks2d, self.emb)
            return logits[:n_rows], None

        next2d = jnp.pad(next_flat, (0, pad)).reshape(n_pad, 1)
        cost = pl.CostEstimate(
            flops=2 * n_pad * V * V,
            transcendentals=n_pad * V,
            bytes_accessed=(V * V + 2 * n_pad * V) * 4)
        logits, loss_rows = pl.pallas_call(
            functools.partial(_resident_ce_kernel, n_rows=n_rows),
            out_shape=(jax.ShapeDtypeStruct((n_pad, V), jnp.float32),
                       jax.ShapeDtypeStruct((n_pad, 1), jnp.float32)),
            grid_spec=pltpu.PrefetchScalarGridSpec(
                num_scalar_prefetch=0, grid=grid,
                in_specs=[toks_spec, loss_spec, emb_spec],   # toks, next, emb
                out_specs=(logits_spec, loss_spec)),
            compiler_params=params,
            cost_estimate=cost,
        )(toks2d, next2d, self.emb)
        loss = jnp.sum(loss_rows) / n_rows          # F.cross_entropy 'mean'
        return logits[:n_rows], loss

    # ---- fallback path: HBM row-gather with manual double-buffered DMAs -------
    def _forward_streamed(self, toks_flat, next_flat, n_rows):
        V = self.vocab_size
        R = self._STREAM_ROWS
        n_pad = _round_up(n_rows, R)
        pad = n_pad - n_rows
        grid = (n_pad // R,)

        toks_pad = jnp.pad(toks_flat, (0, pad))

        emb_spec = pl.BlockSpec(memory_space=pl.ANY)             # stays in HBM
        logits_spec = pl.BlockSpec((R, V), lambda i, toks: (i, 0))
        loss_spec = pl.BlockSpec((R, 1), lambda i, toks: (i, 0))
        scratch = [pltpu.VMEM((2, R, V), jnp.float32),
                   pltpu.SemaphoreType.DMA((2, R))]
        params = pltpu.CompilerParams(dimension_semantics=("arbitrary",))

        if next_flat is None:
            cost = pl.CostEstimate(flops=n_pad * V, transcendentals=0,
                                   bytes_accessed=2 * n_pad * V * 4)
            logits = pl.pallas_call(
                functools.partial(_stream_lookup_kernel, rows_per_block=R),
                out_shape=jax.ShapeDtypeStruct((n_pad, V), jnp.float32),
                grid_spec=pltpu.PrefetchScalarGridSpec(
                    num_scalar_prefetch=1, grid=grid,
                    in_specs=[emb_spec],
                    out_specs=logits_spec,
                    scratch_shapes=scratch),
                compiler_params=params,
                cost_estimate=cost,
            )(toks_pad, self.emb)
            return logits[:n_rows], None

        next2d = jnp.pad(next_flat, (0, pad)).reshape(n_pad, 1)
        cost = pl.CostEstimate(flops=4 * n_pad * V, transcendentals=n_pad * V,
                               bytes_accessed=2 * n_pad * V * 4)
        logits, loss_rows = pl.pallas_call(
            functools.partial(_stream_ce_kernel, rows_per_block=R,
                              n_rows=n_rows),
            out_shape=(jax.ShapeDtypeStruct((n_pad, V), jnp.float32),
                       jax.ShapeDtypeStruct((n_pad, 1), jnp.float32)),
            grid_spec=pltpu.PrefetchScalarGridSpec(
                num_scalar_prefetch=1, grid=grid,
                in_specs=[emb_spec,
                          pl.BlockSpec((R, 1), lambda i, toks: (i, 0))],
                out_specs=(logits_spec, loss_spec),
                scratch_shapes=scratch),
            compiler_params=params,
            cost_estimate=cost,
        )(toks_pad, self.emb, next2d)
        loss = jnp.sum(loss_rows) / n_rows
        return logits[:n_rows], loss


if __name__ == "__main__":
    # Small shapes consistent with the module: V=128 (lane-friendly), T=8, B=2.
    V, T, B = 128, 8, 2

    key = jax.random.PRNGKey(0)
    k_tok, k_nxt, k_emb = jax.random.split(key, 3)
    toks = jax.random.randint(k_tok, (B, T), 0, V, dtype=jnp.int32)
    next_toks = jax.random.randint(k_nxt, (B, T), 0, V, dtype=jnp.int32)

    model = LookupTable(vocab_size=V, block_size=T, key=k_emb)

    # Pure-JAX reference.
    ref_logits = model.emb[toks]                                  # (B, T, V)
    flat = ref_logits.reshape(B * T, V)
    ref_lse = jax.scipy.special.logsumexp(flat, axis=-1)
    ref_tgt = flat[jnp.arange(B * T), next_toks.reshape(-1)]
    ref_loss = jnp.mean(ref_lse - ref_tgt)

    # Fast path (table resident in VMEM, one-hot MXU gather + fused CE).
    out_r, loss_r = model(toks, next_toks)
    out_r = jax.block_until_ready(out_r)
    loss_r = jax.block_until_ready(loss_r)

    out_r_only, loss_none = model(toks, None)
    out_r_only = jax.block_until_ready(out_r_only)
    assert loss_none is None

    # Fallback path (HBM row-gather, double-buffered manual DMAs), forced.
    out_s, loss_s = model(toks, next_toks, force_streamed=True)
    out_s = jax.block_until_ready(out_s)
    loss_s = jax.block_until_ready(loss_s)

    out_s_only, loss_none_s = model(toks, None, force_streamed=True)
    out_s_only = jax.block_until_ready(out_s_only)
    assert loss_none_s is None

    for name, out in (("resident", out_r), ("resident_lookup", out_r_only),
                      ("streamed", out_s), ("streamed_lookup", out_s_only)):
        assert out.shape == (B, T, V), name
        assert jnp.allclose(out, ref_logits, atol=1e-4, rtol=1e-4), name
    assert jnp.allclose(loss_r, ref_loss, atol=1e-4, rtol=1e-4)
    assert jnp.allclose(loss_s, ref_loss, atol=1e-4, rtol=1e-4)

    # TODO(synk): `generate` uses torch.multinomial autoregressive sampling; the
    # host-side loop is not ported (it would just re-invoke this forward pass).
    print("KERNEL_OK")
</pallas_src>

<mosaic_0001>
module attributes {stable_mosaic.version = 11 : i64} {
  func.func @_resident_ce_kernel(%arg0: i32, %arg1: memref<16x1xi32, #tpu.memory_space<vmem>>, %arg2: memref<16x1xi32, #tpu.memory_space<vmem>>, %arg3: memref<128x128xf32, #tpu.memory_space<vmem>>, %arg4: memref<16x128xf32, #tpu.memory_space<vmem>>, %arg5: memref<16x1xf32, #tpu.memory_space<vmem>>) attributes {dimension_semantics = [#tpu.dimension_semantics<parallel>], iteration_bounds = array<i64: 1>, scalar_prefetch = 0 : i64, scratch_operands = 0 : i64, tpu.core_type = #tpu.core_type<tc>, window_params = [{transform_indices = @transform_0, window_bounds = array<i64: 16, 1>}, {transform_indices = @transform_1, window_bounds = array<i64: 16, 1>}, {pipeline_mode = #tpu.pipeline_mode<synchronous>, transform_indices = @transform_2, window_bounds = array<i64: 128, 128>}, {transform_indices = @transform_3, window_bounds = array<i64: 16, 128>}, {transform_indices = @transform_4, window_bounds = array<i64: 16, 1>}]} {
    %0 = tpu.iota {dimensions = array<i32: 1>} : vector<16x128xi32>
    %c0 = arith.constant 0 : index
    %c0_0 = arith.constant 0 : index
    %1 = vector.load %arg1[%c0, %c0_0] : memref<16x1xi32, #tpu.memory_space<vmem>>, vector<16x1xi32>
    %2 = vector.broadcast %1 : vector<16x1xi32> to vector<16x128xi32>
    %3 = arith.cmpi eq, %0, %2 : vector<16x128xi32>
    %cst = arith.constant 1.000000e+00 : f32
    %cst_1 = arith.constant 0.000000e+00 : f32
    %4 = vector.broadcast %cst : f32 to vector<16x128xf32>
    %5 = vector.broadcast %cst_1 : f32 to vector<16x128xf32>
    %6 = arith.select %3, %4, %5 : vector<16x128xi1>, vector<16x128xf32>
    %c0_2 = arith.constant 0 : index
    %c0_3 = arith.constant 0 : index
    %7 = vector.load %arg3[%c0_2, %c0_3] : memref<128x128xf32, #tpu.memory_space<vmem>>, vector<128x128xf32>
    %cst_4 = arith.constant dense<0.000000e+00> : vector<16x128xf32>
    %8 = tpu.matmul %6, %7, %cst_4 {dimension_numbers = #tpu.dot_dimension_numbers<[1], [0], [0], [1], [0, 0, 1, 1], [], []>} : vector<16x128xf32>, vector<128x128xf32>, vector<16x128xf32> -> vector<16x128xf32>
    %c0_5 = arith.constant 0 : index
    %c0_6 = arith.constant 0 : index
    %9 = vector.load %arg4[%c0_5, %c0_6] : memref<16x128xf32, #tpu.memory_space<vmem>>, vector<16x128xf32>
    tpu.vector_store %arg4[%c0_5, %c0_6], %8 {strides = array<i32>} : memref<16x128xf32, #tpu.memory_space<vmem>>, vector<16x128xf32>,
    %c16_i32 = arith.constant 16 : i32
    %10 = arith.muli %arg0, %c16_i32 : i32
    %c0_7 = arith.constant 0 : index
    %c0_8 = arith.constant 0 : index
    %11 = vector.load %arg2[%c0_7, %c0_8] : memref<16x1xi32, #tpu.memory_space<vmem>>, vector<16x1xi32>
    %cst_9 = arith.constant dense<0xFF800000> : vector<16xf32>
    %12 = vector.multi_reduction <maximumf>, %8, %cst_9 [1] : vector<16x128xf32> to vector<16xf32>
    %13 = vector.shape_cast %12 : vector<16xf32> to vector<16x1xf32>
    %14 = vector.broadcast %13 : vector<16x1xf32> to vector<16x128xf32>
    %15 = arith.subf %8, %14 : vector<16x128xf32>
    %16 = math.exp %15 : vector<16x128xf32>
    %cst_10 = arith.constant dense<0.000000e+00> : vector<16xf32>
    %17 = vector.multi_reduction <add>, %16, %cst_10 [1] : vector<16x128xf32> to vector<16xf32>
    %18 = vector.shape_cast %17 : vector<16xf32> to vector<16x1xf32>
    %19 = math.log %18 : vector<16x1xf32>
    %20 = arith.addf %13, %19 : vector<16x1xf32>
    %21 = tpu.iota {dimensions = array<i32: 1>} : vector<16x128xi32>
    %22 = vector.broadcast %11 : vector<16x1xi32> to vector<16x128xi32>
    %23 = arith.cmpi eq, %21, %22 : vector<16x128xi32>
    %cst_11 = arith.constant 0.000000e+00 : f32
    %24 = vector.broadcast %cst_11 : f32 to vector<16x128xf32>
    %25 = arith.select %23, %8, %24 : vector<16x128xi1>, vector<16x128xf32>
    %cst_12 = arith.constant dense<0.000000e+00> : vector<16xf32>
    %26 = vector.multi_reduction <add>, %25, %cst_12 [1] : vector<16x128xf32> to vector<16xf32>
    %27 = vector.shape_cast %26 : vector<16xf32> to vector<16x1xf32>
    %28 = tpu.iota {dimensions = array<i32: 0>} : vector<16x1xi32>
    %29 = vector.broadcast %10 : i32 to vector<16x1xi32>
    %30 = arith.addi %29, %28 : vector<16x1xi32>
    %c16_i32_13 = arith.constant 16 : i32
    %31 = vector.broadcast %c16_i32_13 : i32 to vector<16x1xi32>
    %32 = arith.cmpi slt, %30, %31 : vector<16x1xi32>
    %33 = arith.subf %20, %27 : vector<16x1xf32>
    %cst_14 = arith.constant 0.000000e+00 : f32
    %34 = vector.broadcast %cst_14 : f32 to vector<16x1xf32>
    %35 = arith.select %32, %33, %34 : vector<16x1xi1>, vector<16x1xf32>
    %c0_15 = arith.constant 0 : index
    %c0_16 = arith.constant 0 : index
    %36 = vector.load %arg5[%c0_15, %c0_16] : memref<16x1xf32, #tpu.memory_space<vmem>>, vector<16x1xf32>
    tpu.vector_store %arg5[%c0_15, %c0_16], %35 {strides = array<i32>} : memref<16x1xf32, #tpu.memory_space<vmem>>, vector<16x1xf32>,
    return
  }
  func.func @transform_0(%arg0: i32) -> (i32, i32) {
    %c0_i32 = arith.constant 0 : i32
    %c0_i32_0 = arith.constant 0 : i32
    return %arg0, %c0_i32 : i32, i32
  }
  func.func @transform_1(%arg0: i32) -> (i32, i32) {
    %c0_i32 = arith.constant 0 : i32
    %c0_i32_0 = arith.constant 0 : i32
    return %arg0, %c0_i32 : i32, i32
  }
  func.func @transform_2(%arg0: i32) -> (i32, i32) {
    %c0_i32 = arith.constant 0 : i32
    %c0_i32_0 = arith.constant 0 : i32
    %c0_i32_1 = arith.constant 0 : i32
    return %c0_i32, %c0_i32_0 : i32, i32
  }
  func.func @transform_3(%arg0: i32) -> (i32, i32) {
    %c0_i32 = arith.constant 0 : i32
    %c0_i32_0 = arith.constant 0 : i32
    return %arg0, %c0_i32 : i32, i32
  }
  func.func @transform_4(%arg0: i32) -> (i32, i32) {
    %c0_i32 = arith.constant 0 : i32
    %c0_i32_0 = arith.constant 0 : i32
    return %arg0, %c0_i32 : i32, i32
  }
}

</mosaic_0001>

<llo_original>
// kernel: tpu_custom_call.1
$region0: #{tpu_custom_call.1}
  #allocation0 [shape = 'u32[]', space=smem, size = 0x4, offset = 0x4, fixed_abs, tag = 'smem constant byte address 0x4 - core index']
  #allocation1 [shape = 'u32[72,128]{1,0:T(1,128)}', space=vmem, size = 0x9000, scoped, tag = 'internal scratch']
  %s0 = inlined_call_operand.vmem [shape: s32[16,1], index: 0, kind: input, shape index: {}]
  %s1 = inlined_call_operand.vmem [shape: s32[16,1], index: 1, kind: input, shape index: {}]
  %s2 = inlined_call_operand.hbm [shape: f32[128,128], index: 2, kind: input, shape index: {}]
  %s3 = inlined_call_operand.hbm [shape: f32[16,128], index: 3, kind: output, shape index: {0}]
  %s4 = inlined_call_operand.vmem [shape: f32[16,1], index: 4, kind: output, shape index: {1}]
  %5 = xla_tuple %s3, %s4
  %s6 = sld [smem:[#allocation0]]
  $region34: #{tpu_custom_call.1} parent=0
    _
  %s8 = ssub.s32 1, %s6
  %s9 = scalar_select 0, %s8, %s6
  $region1: #{tpu_custom_call.1} parent=0
    #allocation2 [shape = 'u8[65536]{0}', space=vmem, size = 0x10000, scoped, tag = 'input window, operand 2, single buffered']
    #allocation3 [shape = 's32[1]{0}', space=sflag, size = 0x4, scoped, tag = 'scoped memory for tpu_custom_call.1']
    #allocation4 [shape = 's32[1]{0}', space=sflag, size = 0x4, scoped, tag = 'scoped memory for tpu_custom_call.1']
    #allocation5 [shape = 'u8[8192]{0}', space=vmem, size = 0x2000, scoped, tag = 'output window, operand 0, single buffered']
    %10 = vsyncpa [#allocation3], 0
    %11 = vsyncpa [#allocation4], 0
    // Predicated region
    $region2: #{tpu_custom_call.1} parent=1 // pred_check
      _
    $region3: #{tpu_custom_call.1} parent=1 // pred_check_branch
      %13 = sbr.rel (0) target = $region5
    $region4: #{tpu_custom_call.1} parent=1 // pred_region
      _
    $region5: #{tpu_custom_call.1} parent=1 // pred_fallthru
      _
    // Predicated region
    $region6: #{tpu_custom_call.1} parent=1 // pred_check
      _
    $region7: #{tpu_custom_call.1} parent=1 // pred_check_branch
      %15 = sbr.rel (0) target = $region9
    $region8: #{tpu_custom_call.1} parent=1 // pred_region
      _
    $region9: #{tpu_custom_call.1} parent=1 // pred_fallthru
      _
    // Predicated region
    $region10: #{tpu_custom_call.1} parent=1 // pred_check
      _
    $region11: #{tpu_custom_call.1} parent=1 // pred_check_branch
      %17 = sbr.rel (0) target = $region13
    $region12: #{tpu_custom_call.1} parent=1 // pred_region
      %19 = vsyncadd [#allocation3], 0
      %s20 = sshll.u32 %s2, 4
      %s21 = int_to_ptr.hbm [resolvable:$true] %s20
      %s22 = sshll.u32 [#allocation2], 4
      %s23 = int_to_ptr.vmem [resolvable:$true] %s22
      %28 = dma.hbm_to_vmem [thread:$0]  %s21, 2048, %s23, [#allocation3], 128, 128, 8
    $region13: #{tpu_custom_call.1} parent=1 // pred_fallthru
      _
    // Predicated region
    $region14: #{tpu_custom_call.1} parent=1 // pred_check
      _
    $region15: #{tpu_custom_call.1} parent=1 // pred_check_branch
      %30 = sbr.rel (0) target = $region17
    $region16: #{tpu_custom_call.1} parent=1 // pred_region
      %32 = dma.done [#allocation3], 2048
    $region17: #{tpu_custom_call.1} parent=1 // pred_fallthru
      _
    %v33 = vlaneseq
    %v34 = vand.u32 %v33, 127
    %v35 = vld [vmem:[%s0] sm:$0xff]
    %v36 = vld [vmem:[%s0 + $0x8] sm:$0xff]
    %37 = vset.pattern.permute.xlu0 0
    %38 = vperm.xlu0 %37, %v35
    %v39 = vpop.permute.xlu0 %38
    %40 = vset.pattern.permute.xlu0 0
    %41 = vperm.xlu0 %40, %v36
    %v42 = vpop.permute.xlu0 %41
    %vm43 = vcmp.eq.s32.totalorder %v34, %v39
    %vm44 = vcmp.eq.s32.totalorder %v34, %v42
    %v45 = vsel %vm43, 1.0, 0.0
    %v46 = vsel %vm44, 1.0, 0.0
    %v47 = vld [vmem:[#allocation2] sm:$0xff]
    %v48 = vld [vmem:[#allocation2 + $0x8] sm:$0xff]
    %v49 = vld [vmem:[#allocation2 + $0x10] sm:$0xff]
    %v50 = vld [vmem:[#allocation2 + $0x18] sm:$0xff]
    %v51 = vld [vmem:[#allocation2 + $0x20] sm:$0xff]
    %v52 = vld [vmem:[#allocation2 + $0x28] sm:$0xff]
    %v53 = vld [vmem:[#allocation2 + $0x30] sm:$0xff]
    %v54 = vld [vmem:[#allocation2 + $0x38] sm:$0xff]
    %v55 = vld [vmem:[#allocation2 + $0x40] sm:$0xff]
    %v56 = vld [vmem:[#allocation2 + $0x48] sm:$0xff]
    %v57 = vld [vmem:[#allocation2 + $0x50] sm:$0xff]
    %v58 = vld [vmem:[#allocation2 + $0x58] sm:$0xff]
    %v59 = vld [vmem:[#allocation2 + $0x60] sm:$0xff]
    %v60 = vld [vmem:[#allocation2 + $0x68] sm:$0xff]
    %v61 = vld [vmem:[#allocation2 + $0x70] sm:$0xff]
    %v62 = vld [vmem:[#allocation2 + $0x78] sm:$0xff]
    %63 = vmatpush.msra.mxu0 %v62
    %64 = vmatpush.msra.mxu0 %v61
    %65 = vmatpush.msra.mxu0 %v60
    %66 = vmatpush.msra.mxu0 %v59
    %67 = vmatpush.msra.mxu0 %v58
    %68 = vmatpush.msra.mxu0 %v57
    %69 = vmatpush.msra.mxu0 %v56
    %70 = vmatpush.msra.mxu0 %v55
    %71 = vmatpush.msra.mxu0 %v54
    %72 = vmatpush.msra.mxu0 %v53
    %73 = vmatpush.msra.mxu0 %v52
    %74 = vmatpush.msra.mxu0 %v51
    %75 = vmatpush.msra.mxu0 %v50
    %76 = vmatpush.msra.mxu0 %v49
    %77 = vmatpush.msra.mxu0 %v48
    %78 = vmatpush.msra.mxu0 %v47
    %79 = vmatmul.f32.gmra.mxu0 %v45
    %v80 = vpop.f32.mrf.mxu0
    %v81 = vadd.f32 0.0, %v80
    %82 = vmatmul.f32.gmra.mxu0 %v46
    %v83 = vpop.f32.mrf.mxu0
    %v84 = vadd.f32 0.0, %v83
    %85 = vdwg.mxu0
    %86 = vst [vmem:[#allocation5] sm:$0xff] %v81
    %87 = vst [vmem:[#allocation5 + $0x8] sm:$0xff] %v84
    %s88 = smul.u32 0, 16
    %v89 = vld [vmem:[%s1] sm:$0xff]
    %v90 = vld [vmem:[%s1 + $0x8] sm:$0xff]
    %91 = vmax.xlane.f32.xlu0 %v81
    %v92 = vpop.xlane.xlu0 %91
    %93 = vmax.xlane.f32.xlu0 %v84
    %v94 = vpop.xlane.xlu0 %93
    %v95 = vsub.f32 %v81, %v92
    %v96 = vsub.f32 %v84, %v94
    %v97 = vmul.f32 %v95, 1.442695
    %v98 = vpow.pop %v97
    %v99 = vmul.f32 %v96, 1.442695
    %v100 = vpow.pop %v99
    %101 = vadd.xlane.f32.xlu0 %v98
    %v102 = vpop.xlane.xlu0 %101
    %103 = vadd.xlane.f32.xlu0 %v100
    %v104 = vpop.xlane.xlu0 %103
    %v105 = vlog2.pop %v102
    %v106 = vmul.f32 %v105, 0.6931472
    %v107 = vlog2.pop %v104
    %v108 = vmul.f32 %v107, 0.6931472
    %v109 = vadd.f32 %v92, %v106
    %v110 = vadd.f32 %v94, %v108
    %111 = vset.pattern.permute.xlu0 0
    %112 = vperm.xlu0 %111, %v89
    %v113 = vpop.permute.xlu0 %112
    %114 = vset.pattern.permute.xlu0 0
    %115 = vperm.xlu0 %114, %v90
    %v116 = vpop.permute.xlu0 %115
    %vm117 = vcmp.eq.s32.totalorder %v34, %v113
    %vm118 = vcmp.eq.s32.totalorder %v34, %v116
    %v119 = vsel %vm117, %v81, 0.0
    %v120 = vsel %vm118, %v84, 0.0
    %121 = vadd.xlane.f32.xlu0 %v119
    %v122 = vpop.xlane.xlu0 %121
    %123 = vadd.xlane.f32.xlu0 %v120
    %v124 = vpop.xlane.xlu0 %123
    %v125 = vlaneseq
    %v126 = vshrl.u32 %v125, 7
    %v127 = vadd.s32 %v126, 8
    %v128 = vstv %s88
    %v129 = vadd.s32 %v128, %v126
    %v130 = vadd.s32 %v128, %v127
    %vm131 = vcmp.lt.s32.totalorder %v129, 16
    %vm132 = vcmp.lt.s32.totalorder %v130, 16
    %v133 = vsub.f32 %v109, %v122
    %v134 = vsub.f32 %v110, %v124
    %v135 = vsel %vm131, %v133, 0.0
    %v136 = vsel %vm132, %v134, 0.0
    %vm137 = vcmask 7168
    %138 = vst.msk [vmem:[%s4] sm:$0xff] %vm137, %v135
    %139 = vst.msk [vmem:[%s4 + $0x8] sm:$0xff] %vm137, %v136
    // Predicated region
    $region18: #{tpu_custom_call.1} parent=1 // pred_check
      _
    $region19: #{tpu_custom_call.1} parent=1 // pred_check_branch
      %141 = sbr.rel (0) target = $region21
    $region20: #{tpu_custom_call.1} parent=1 // pred_region
      %143 = vsyncadd [#allocation4], 0
      %s144 = sshll.u32 [#allocation5], 4
      %s145 = int_to_ptr.vmem [resolvable:$true] %s144
      %s146 = sshll.u32 %s3, 4
      %s147 = int_to_ptr.hbm [resolvable:$true] %s146
      %152 = dma.vmem_to_hbm [thread:$0]  %s145, 256, %s147, [#allocation4], 128, 128, 8
    $region21: #{tpu_custom_call.1} parent=1 // pred_fallthru
      _
    // Predicated region
    $region22: #{tpu_custom_call.1} parent=1 // pred_check
      _
    $region23: #{tpu_custom_call.1} parent=1 // pred_check_branch
      %154 = sbr.rel (0) target = $region25
    $region24: #{tpu_custom_call.1} parent=1 // pred_region
      _
    $region25: #{tpu_custom_call.1} parent=1 // pred_fallthru
      _
    // Predicated region
    $region26: #{tpu_custom_call.1} parent=1 // pred_check
      _
    $region27: #{tpu_custom_call.1} parent=1 // pred_check_branch
      %156 = sbr.rel (0) target = $region29
    $region28: #{tpu_custom_call.1} parent=1 // pred_region
      %158 = dma.done [#allocation4], 256
    $region29: #{tpu_custom_call.1} parent=1 // pred_fallthru
      _
    // Predicated region
    $region30: #{tpu_custom_call.1} parent=1 // pred_check
      _
    $region31: #{tpu_custom_call.1} parent=1 // pred_check_branch
      %160 = sbr.rel (0) target = $region33
    $region32: #{tpu_custom_call.1} parent=1 // pred_region
      _
    $region33: #{tpu_custom_call.1} parent=1 // pred_fallthru
      _
    %161 = vsyncpa [#allocation3], 1
    %162 = vsyncpa [#allocation4], 1

</llo_original>
